<compile_context>
chip_gen: v6e
topology: v6e:2x2x1
jax: 0.10.0
libtpu: 0.0.40
codegen_flags: <defaults>
</compile_context>

<pallas_src>
import functools

import numpy as np
import jax
import jax.numpy as jnp
from jax.experimental import pallas as pl
from jax.experimental.pallas import tpu as pltpu


def _round_up(x: int, m: int) -> int:
    return (x + m - 1) // m * m


def _device_vmem_bytes() -> int:
    try:
        return int(pltpu.get_tpu_info().vmem_capacity_bytes)
    except Exception:
        return 64 * 1024 * 1024  # v7x per-TensorCore VMEM; safe lower bound


# ---------------------------------------------------------------------------
# Kernels
# ---------------------------------------------------------------------------

def _mlp_kernel(x_ref, w1_ref, b1_ref, w2_ref, b2_ref, o_ref):
    """Resident-W1 path: one batch tile per grid step, weights stay in VMEM."""
    h = jnp.dot(x_ref[...], w1_ref[...], preferred_element_type=jnp.float32)
    h = jnp.maximum(h + b1_ref[...], 0.0)                    # bias f32, broadcasts
    o = jnp.dot(h.astype(w2_ref.dtype), w2_ref[...],
                preferred_element_type=jnp.float32)
    o_ref[...] = (o + b2_ref[...]).astype(o_ref.dtype)


def _mlp_kernel_ktiled(x_ref, w1_ref, b1_ref, w2_ref, b2_ref, o_ref, h_acc):
    """K-tiled path: grid=(batch tiles, K tiles); hidden accumulated in VMEM."""
    k = pl.program_id(1)

    @pl.when(k == 0)
    def _():
        h_acc[...] = jnp.zeros_like(h_acc)

    h_acc[...] += jnp.dot(x_ref[...], w1_ref[...],
                          preferred_element_type=jnp.float32)

    @pl.when(k == pl.num_programs(1) - 1)
    def _():
        h = jnp.maximum(h_acc[...] + b1_ref[...], 0.0)
        o = jnp.dot(h.astype(w2_ref.dtype), w2_ref[...],
                    preferred_element_type=jnp.float32)
        o_ref[...] = (o + b2_ref[...]).astype(o_ref.dtype)


# ---------------------------------------------------------------------------
# Parameter preparation (hoisted out of the per-call path)
# ---------------------------------------------------------------------------

def prepare_params(w1, b1, w2, b2, *, compute_dtype=None, k_block=None):
    """Pad / cast the Linear weights once.

    w1 : [D_in, D_in]  (laid out so the kernel computes x @ w1, i.e. the
                        transpose of PyTorch nn.Linear.weight), b1 : [D_in]
    w2 : [D_in, D_out], b2 : [D_out]
    """
    D_in = int(w1.shape[0])
    D_out = int(w2.shape[1])
    cdt = np.dtype(compute_dtype) if compute_dtype is not None else np.dtype(w1.dtype)
    elt = cdt.itemsize

    D_out_p = max(_round_up(D_out, 128), 128)      # lane-dense output / W2 columns

    # Decide resident-W1 vs K-tiled path from the device VMEM budget
    # (Pallas double-buffers even constant-index blocks -> factor 2).
    vmem_budget = int(0.85 * _device_vmem_bytes())
    if k_block is None and 2 * D_in * D_in * elt > vmem_budget // 2:
        k_block = 512
    if k_block is not None:
        k_block = _round_up(min(int(k_block), _round_up(D_in, 128)), 128)
        D_in_p = _round_up(D_in, k_block)
    else:
        D_in_p = D_in                               # full-dim blocks; no K padding

    def _pad(a, shape, dtype):
        a = jnp.asarray(a).astype(dtype)
        if a.shape == tuple(shape):
            return a
        buf = jnp.zeros(shape, dtype)
        return buf.at[tuple(slice(0, s) for s in a.shape)].set(a)

    params = dict(
        w1=_pad(w1, (D_in_p, D_in_p), cdt),
        b1=_pad(jnp.asarray(b1).reshape(1, -1), (1, D_in_p), jnp.float32),
        w2=_pad(w2, (D_in_p, D_out_p), cdt),
        b2=_pad(jnp.asarray(b2).reshape(1, -1), (1, D_out_p), jnp.float32),
        d_in=D_in, d_out=D_out, d_in_p=D_in_p, d_out_p=D_out_p,
        k_block=k_block,
    )
    return params


# ---------------------------------------------------------------------------
# Forward
# ---------------------------------------------------------------------------

def _pick_block_m(B, sub, params, elt, cap=512):
    D_in_p, D_out_p, k_block = params["d_in_p"], params["d_out_p"], params["k_block"]
    vmem_budget = int(0.85 * _device_vmem_bytes())

    x_tile_w = D_in_p if k_block is None else k_block
    w1_step = (D_in_p * D_in_p if k_block is None else k_block * D_in_p) * elt
    # Weights/biases: double-buffered by Pallas even with constant index maps.
    fixed = 2 * (w1_step + D_in_p * D_out_p * elt + (D_in_p + D_out_p) * 4)
    per_row = (2 * x_tile_w * elt            # x tiles (double-buffered)
               + 2 * D_out_p * 4             # out tiles (double-buffered)
               + (4 * D_in_p if k_block is not None else 0))  # f32 scratch acc

    bm = min(cap, _round_up(B, sub))
    # Ensure >= 2 batch tiles when the batch allows it (v7x has 2 TensorCores).
    if B > 2 * sub and _round_up(B, bm) == bm:
        bm = _round_up((B + 1) // 2, sub)
    # Shrink until double-buffered tiles + resident weights fit the budget.
    while bm > sub and fixed + bm * per_row > vmem_budget:
        bm = max(sub, _round_up(bm // 2, sub))
    return int(bm)


@functools.partial(jax.jit, static_argnames=("block_m", "k_block", "d_out"))
def _forward_impl(x, w1_p, b1_p, w2_p, b2_p, *, block_m, k_block, d_out):
    B, D_in = x.shape
    D_in_p = w1_p.shape[0]
    D_out_p = w2_p.shape[1]
    out_dtype = x.dtype
    cdt = w1_p.dtype
    elt = np.dtype(cdt).itemsize
    out_elt = np.dtype(out_dtype).itemsize

    B_p = _round_up(B, block_m)
    if B_p == B and D_in_p == D_in and cdt == x.dtype:
        x_p = x
    else:
        x_p = jnp.zeros((B_p, D_in_p), cdt).at[:B, :D_in].set(x.astype(cdt))

    # --- VMEM budget, clamped to the device's actual VMEM -------------------
    vmem_cap = _device_vmem_bytes()
    x_tile_w = D_in_p if k_block is None else k_block
    w1_step = (D_in_p * D_in_p if k_block is None else k_block * D_in_p) * elt
    need = (2 * block_m * x_tile_w * elt
            + 2 * block_m * D_out_p * out_elt
            + 2 * (w1_step + D_in_p * D_out_p * elt + (D_in_p + D_out_p) * 4))
    if k_block is not None:
        need += block_m * D_in_p * 4
    vmem_limit = int(min(int(0.85 * vmem_cap), max(2 * need, 16 * 1024 * 1024)))

    cost = pl.CostEstimate(
        flops=2 * B_p * D_in_p * (D_in_p + D_out_p),
        transcendentals=0,
        bytes_accessed=(x_p.size * elt + w1_p.size * elt + w2_p.size * elt
                        + b1_p.size * 4 + b2_p.size * 4 + B_p * D_out_p * out_elt),
    )

    if k_block is None:
        grid = (B_p // block_m,)
        out_p = pl.pallas_call(
            _mlp_kernel,
            out_shape=jax.ShapeDtypeStruct((B_p, D_out_p), out_dtype),
            grid=grid,
            in_specs=[
                pl.BlockSpec((block_m, D_in_p), lambda i: (i, 0)),   # x tile
                pl.BlockSpec((D_in_p, D_in_p), lambda i: (0, 0)),    # W1 resident
                pl.BlockSpec((1, D_in_p), lambda i: (0, 0)),         # b1
                pl.BlockSpec((D_in_p, D_out_p), lambda i: (0, 0)),   # W2 resident
                pl.BlockSpec((1, D_out_p), lambda i: (0, 0)),        # b2
            ],
            out_specs=pl.BlockSpec((block_m, D_out_p), lambda i: (i, 0)),
            compiler_params=pltpu.CompilerParams(
                dimension_semantics=("parallel",),
                vmem_limit_bytes=vmem_limit),
            cost_estimate=cost,
        )(x_p, w1_p, b1_p, w2_p, b2_p)
    else:
        grid = (B_p // block_m, D_in_p // k_block)
        out_p = pl.pallas_call(
            _mlp_kernel_ktiled,
            out_shape=jax.ShapeDtypeStruct((B_p, D_out_p), out_dtype),
            grid=grid,
            in_specs=[
                pl.BlockSpec((block_m, k_block), lambda i, k: (i, k)),   # x tile
                pl.BlockSpec((k_block, D_in_p), lambda i, k: (k, 0)),    # W1 K-slab
                pl.BlockSpec((1, D_in_p), lambda i, k: (0, 0)),          # b1
                pl.BlockSpec((D_in_p, D_out_p), lambda i, k: (0, 0)),    # W2 resident
                pl.BlockSpec((1, D_out_p), lambda i, k: (0, 0)),         # b2
            ],
            out_specs=pl.BlockSpec((block_m, D_out_p), lambda i, k: (i, 0)),
            scratch_shapes=[pltpu.VMEM((block_m, D_in_p), jnp.float32)],
            compiler_params=pltpu.CompilerParams(
                dimension_semantics=("parallel", "arbitrary"),
                vmem_limit_bytes=vmem_limit),
            cost_estimate=cost,
        )(x_p, w1_p, b1_p, w2_p, b2_p)

    return out_p[:B, :d_out]


def _xla_forward(x, p):
    """Fast path for sub-tile problems where pallas_call overhead dominates."""
    d_in, d_out = p["d_in"], p["d_out"]
    w1 = p["w1"][:d_in, :d_in]
    b1 = p["b1"][0, :d_in]
    w2 = p["w2"][:d_in, :d_out]
    b2 = p["b2"][0, :d_out]
    h = jnp.maximum(jnp.dot(x.astype(w1.dtype), w1,
                            preferred_element_type=jnp.float32) + b1, 0.0)
    o = jnp.dot(h.astype(w2.dtype), w2, preferred_element_type=jnp.float32) + b2
    return o.astype(x.dtype)


def reconsitution_forward(x, params, *, block_m=None, use_pallas=None):
    """Fused dropout(eval) -> Linear -> ReLU -> Linear. x: [B, D_in] -> [B, D_out]."""
    B, D_in = x.shape
    assert D_in == params["d_in"], "input feature dim mismatch with prepared params"

    if use_pallas is None:
        use_pallas = (B * D_in) >= 8 * 128     # below ~1 tile XLA's fused dot wins
    if not use_pallas:
        return _xla_forward(x, params)

    cdt = np.dtype(params["w1"].dtype)
    elt = cdt.itemsize
    sub = 32 if elt == 1 else (16 if elt == 2 else 8)
    if block_m is None:
        block_m = _pick_block_m(B, sub, params, elt)
    else:
        block_m = _round_up(int(block_m), sub)

    return _forward_impl(x, params["w1"], params["b1"], params["w2"], params["b2"],
                         block_m=int(block_m), k_block=params["k_block"],
                         d_out=params["d_out"])


def init_params(key, input_dim, output_dim, dtype=jnp.float32):
    """PyTorch nn.Linear-style init (uniform +/- 1/sqrt(fan_in)); weights already transposed."""
    k1, k2, k3, k4 = jax.random.split(key, 4)
    bound = 1.0 / (input_dim ** 0.5)
    w1 = jax.random.uniform(k1, (input_dim, input_dim), dtype, -bound, bound)
    b1 = jax.random.uniform(k2, (input_dim,), dtype, -bound, bound)
    w2 = jax.random.uniform(k3, (input_dim, output_dim), dtype, -bound, bound)
    b2 = jax.random.uniform(k4, (output_dim,), dtype, -bound, bound)
    return w1, b1, w2, b2


if __name__ == "__main__":
    key = jax.random.PRNGKey(0)
    k_x, k_p, k_x2, k_p2 = jax.random.split(key, 4)

    # Case 1: the module's natural small shapes (resident-W1 path), forced
    # through the Pallas kernel so the kernel itself is exercised.
    batch, input_dim, output_dim = 8, 32, 16
    x = jax.random.normal(k_x, (batch, input_dim), jnp.float32)
    w1, b1, w2, b2 = init_params(k_p, input_dim, output_dim)
    params = prepare_params(w1, b1, w2, b2)
    out = jax.block_until_ready(reconsitution_forward(x, params, use_pallas=True))
    ref = jnp.maximum(x @ w1 + b1, 0.0) @ w2 + b2
    assert out.shape == (batch, output_dim)
    assert jnp.allclose(out, ref, atol=1e-5, rtol=1e-5), float(
        jnp.max(jnp.abs(out - ref)))

    # Case 2: K-tiled reduction path (forced via k_block) + >=2 batch tiles.
    batch2, input_dim2, output_dim2 = 96, 256, 16
    x2 = jax.random.normal(k_x2, (batch2, input_dim2), jnp.float32)
    w1b, b1b, w2b, b2b = init_params(k_p2, input_dim2, output_dim2)
    params2 = prepare_params(w1b, b1b, w2b, b2b, k_block=128)
    out2 = jax.block_until_ready(reconsitution_forward(x2, params2, use_pallas=True))
    ref2 = jnp.maximum(x2 @ w1b + b1b, 0.0) @ w2b + b2b
    assert out2.shape == (batch2, output_dim2)
    assert jnp.allclose(out2, ref2, atol=1e-4, rtol=1e-4), float(
        jnp.max(jnp.abs(out2 - ref2)))

    print("KERNEL_OK")
</pallas_src>

<mosaic_0001>
module attributes {stable_mosaic.version = 11 : i64} {
  func.func @_mlp_kernel(%arg0: i32, %arg1: memref<8x32xf32, #tpu.memory_space<vmem>>, %arg2: memref<32x32xf32, #tpu.memory_space<vmem>>, %arg3: memref<1x32xf32, #tpu.memory_space<vmem>>, %arg4: memref<32x128xf32, #tpu.memory_space<vmem>>, %arg5: memref<1x128xf32, #tpu.memory_space<vmem>>, %arg6: memref<8x128xf32, #tpu.memory_space<vmem>>) attributes {dimension_semantics = [#tpu.dimension_semantics<parallel>], iteration_bounds = array<i64: 1>, scalar_prefetch = 0 : i64, scratch_operands = 0 : i64, tpu.core_type = #tpu.core_type<tc>, window_params = [{transform_indices = @transform_0, window_bounds = array<i64: 8, 32>}, {pipeline_mode = #tpu.pipeline_mode<synchronous>, transform_indices = @transform_1, window_bounds = array<i64: 32, 32>}, {pipeline_mode = #tpu.pipeline_mode<synchronous>, transform_indices = @transform_2, window_bounds = array<i64: 1, 32>}, {pipeline_mode = #tpu.pipeline_mode<synchronous>, transform_indices = @transform_3, window_bounds = array<i64: 32, 128>}, {pipeline_mode = #tpu.pipeline_mode<synchronous>, transform_indices = @transform_4, window_bounds = array<i64: 1, 128>}, {transform_indices = @transform_5, window_bounds = array<i64: 8, 128>}]} {
    %c0 = arith.constant 0 : index
    %c0_0 = arith.constant 0 : index
    %0 = vector.load %arg1[%c0, %c0_0] : memref<8x32xf32, #tpu.memory_space<vmem>>, vector<8x32xf32>
    %c0_1 = arith.constant 0 : index
    %c0_2 = arith.constant 0 : index
    %1 = vector.load %arg2[%c0_1, %c0_2] : memref<32x32xf32, #tpu.memory_space<vmem>>, vector<32x32xf32>
    %cst = arith.constant dense<0.000000e+00> : vector<8x32xf32>
    %2 = tpu.matmul %0, %1, %cst {dimension_numbers = #tpu.dot_dimension_numbers<[1], [0], [0], [1], [0, 0, 1, 1], [], []>} : vector<8x32xf32>, vector<32x32xf32>, vector<8x32xf32> -> vector<8x32xf32>
    %c0_3 = arith.constant 0 : index
    %c0_4 = arith.constant 0 : index
    %3 = vector.load %arg3[%c0_3, %c0_4] : memref<1x32xf32, #tpu.memory_space<vmem>>, vector<1x32xf32>
    %4 = vector.broadcast %3 : vector<1x32xf32> to vector<8x32xf32>
    %5 = arith.addf %2, %4 : vector<8x32xf32>
    %cst_5 = arith.constant 0.000000e+00 : f32
    %6 = vector.broadcast %cst_5 : f32 to vector<8x32xf32>
    %7 = arith.maximumf %5, %6 : vector<8x32xf32>
    %c0_6 = arith.constant 0 : index
    %c0_7 = arith.constant 0 : index
    %8 = vector.load %arg4[%c0_6, %c0_7] : memref<32x128xf32, #tpu.memory_space<vmem>>, vector<32x128xf32>
    %cst_8 = arith.constant dense<0.000000e+00> : vector<8x128xf32>
    %9 = tpu.matmul %7, %8, %cst_8 {dimension_numbers = #tpu.dot_dimension_numbers<[1], [0], [0], [1], [0, 0, 1, 1], [], []>} : vector<8x32xf32>, vector<32x128xf32>, vector<8x128xf32> -> vector<8x128xf32>
    %c0_9 = arith.constant 0 : index
    %c0_10 = arith.constant 0 : index
    %10 = vector.load %arg5[%c0_9, %c0_10] : memref<1x128xf32, #tpu.memory_space<vmem>>, vector<1x128xf32>
    %11 = vector.broadcast %10 : vector<1x128xf32> to vector<8x128xf32>
    %12 = arith.addf %9, %11 : vector<8x128xf32>
    %c0_11 = arith.constant 0 : index
    %c0_12 = arith.constant 0 : index
    %13 = vector.load %arg6[%c0_11, %c0_12] : memref<8x128xf32, #tpu.memory_space<vmem>>, vector<8x128xf32>
    tpu.vector_store %arg6[%c0_11, %c0_12], %12 {strides = array<i32>} : memref<8x128xf32, #tpu.memory_space<vmem>>, vector<8x128xf32>,
    return
  }
  func.func @transform_0(%arg0: i32) -> (i32, i32) {
    %c0_i32 = arith.constant 0 : i32
    %c0_i32_0 = arith.constant 0 : i32
    return %arg0, %c0_i32 : i32, i32
  }
  func.func @transform_1(%arg0: i32) -> (i32, i32) {
    %c0_i32 = arith.constant 0 : i32
    %c0_i32_0 = arith.constant 0 : i32
    %c0_i32_1 = arith.constant 0 : i32
    return %c0_i32, %c0_i32_0 : i32, i32
  }
  func.func @transform_2(%arg0: i32) -> (i32, i32) {
    %c0_i32 = arith.constant 0 : i32
    %c0_i32_0 = arith.constant 0 : i32
    %c0_i32_1 = arith.constant 0 : i32
    return %c0_i32, %c0_i32_0 : i32, i32
  }
  func.func @transform_3(%arg0: i32) -> (i32, i32) {
    %c0_i32 = arith.constant 0 : i32
    %c0_i32_0 = arith.constant 0 : i32
    %c0_i32_1 = arith.constant 0 : i32
    return %c0_i32, %c0_i32_0 : i32, i32
  }
  func.func @transform_4(%arg0: i32) -> (i32, i32) {
    %c0_i32 = arith.constant 0 : i32
    %c0_i32_0 = arith.constant 0 : i32
    %c0_i32_1 = arith.constant 0 : i32
    return %c0_i32, %c0_i32_0 : i32, i32
  }
  func.func @transform_5(%arg0: i32) -> (i32, i32) {
    %c0_i32 = arith.constant 0 : i32
    %c0_i32_0 = arith.constant 0 : i32
    return %arg0, %c0_i32 : i32, i32
  }
}

</mosaic_0001>

<llo_original>
// kernel: _forward_impl.1
$region0: #{_forward_impl.1}
  #allocation0 [shape = 'u32[]', space=smem, size = 0x4, offset = 0x4, fixed_abs, tag = 'smem constant byte address 0x4 - core index']
  #allocation1 [shape = 'u32[144,128]{1,0:T(1,128)}', space=vmem, size = 0x12000, scoped, tag = 'internal scratch']
  %s0 = inlined_call_operand.hbm [shape: f32[8,32], index: 0, kind: input, shape index: {}]
  %s1 = inlined_call_operand.hbm [shape: f32[32,32], index: 1, kind: input, shape index: {}]
  %s2 = inlined_call_operand.vmem [shape: f32[1,32], index: 2, kind: input, shape index: {}]
  %s3 = inlined_call_operand.hbm [shape: f32[32,128], index: 3, kind: input, shape index: {}]
  %s4 = inlined_call_operand.vmem [shape: f32[1,128], index: 4, kind: input, shape index: {}]
  %s5 = inlined_call_operand.hbm [shape: f32[8,128], index: 5, kind: output, shape index: {}]
  %s6 = sld [smem:[#allocation0]]
  $region42: #{_forward_impl.1} parent=0
    _
  %s8 = ssub.s32 1, %s6
  %s9 = scalar_select 0, %s8, %s6
  $region1: #{_forward_impl.1} parent=0
    #allocation2 [shape = 'u8[4096]{0}', space=vmem, size = 0x1000, scoped, tag = 'input window, operand 0, single buffered']
    #allocation3 [shape = 's32[1]{0}', space=sflag, size = 0x4, scoped, tag = 'scoped memory for _forward_impl.1']
    #allocation4 [shape = 's32[1]{0}', space=sflag, size = 0x4, scoped, tag = 'scoped memory for _forward_impl.1']
    #allocation5 [shape = 'u8[16384]{0}', space=vmem, size = 0x4000, scoped, tag = 'input window, operand 1, single buffered']
    #allocation6 [shape = 's32[1]{0}', space=sflag, size = 0x4, scoped, tag = 'scoped memory for _forward_impl.1']
    #allocation7 [shape = 'u8[16384]{0}', space=vmem, size = 0x4000, scoped, tag = 'input window, operand 3, single buffered']
    #allocation8 [shape = 'u8[4096]{0}', space=vmem, size = 0x1000, scoped, tag = 'output window, operand 0, single buffered']
    %10 = vsyncpa [#allocation3], 0
    %11 = vsyncpa [#allocation6], 0
    %12 = vsyncpa [#allocation4], 0
    // Predicated region
    $region2: #{_forward_impl.1} parent=1 // pred_check
      _
    $region3: #{_forward_impl.1} parent=1 // pred_check_branch
      %14 = sbr.rel (0) target = $region5
    $region4: #{_forward_impl.1} parent=1 // pred_region
      %s16 = ssub.s32 128, 128
      %17 = vsyncadd [#allocation3], %s16
      %s19 = sshll.u32 [#allocation2], 4
      %s20 = int_to_ptr.vmem [resolvable:$true] %s19
      %22 = dma.hbm_to_vmem [thread:$0]  %s0, 128, %s20, [#allocation3]
    $region5: #{_forward_impl.1} parent=1 // pred_fallthru
      _
    // Predicated region
    $region6: #{_forward_impl.1} parent=1 // pred_check
      _
    $region7: #{_forward_impl.1} parent=1 // pred_check_branch
      %24 = sbr.rel (0) target = $region9
    $region8: #{_forward_impl.1} parent=1 // pred_region
      %s26 = ssub.s32 512, 512
      %27 = vsyncadd [#allocation6], %s26
      %s28 = sshll.u32 [#allocation5], 4
      %s29 = int_to_ptr.vmem [resolvable:$true] %s28
      %34 = dma.hbm_to_vmem [thread:$0]  %s1, 512, %s29, [#allocation6], 128, 128, 8
    $region9: #{_forward_impl.1} parent=1 // pred_fallthru
      _
    // Predicated region
    $region10: #{_forward_impl.1} parent=1 // pred_check
      _
    $region11: #{_forward_impl.1} parent=1 // pred_check_branch
      %36 = sbr.rel (0) target = $region13
    $region12: #{_forward_impl.1} parent=1 // pred_region
      _
    $region13: #{_forward_impl.1} parent=1 // pred_fallthru
      _
    // Predicated region
    $region14: #{_forward_impl.1} parent=1 // pred_check
      _
    $region15: #{_forward_impl.1} parent=1 // pred_check_branch
      %38 = sbr.rel (0) target = $region17
    $region16: #{_forward_impl.1} parent=1 // pred_region
      %s40 = ssub.s32 512, 512
      %41 = vsyncadd [#allocation6], %s40
      %s42 = sshll.u32 [#allocation7], 4
      %s43 = int_to_ptr.vmem [resolvable:$true] %s42
      %48 = dma.hbm_to_vmem [thread:$0]  %s3, 512, %s43, [#allocation6], 128, 128, 8
    $region17: #{_forward_impl.1} parent=1 // pred_fallthru
      _
    // Predicated region
    $region18: #{_forward_impl.1} parent=1 // pred_check
      _
    $region19: #{_forward_impl.1} parent=1 // pred_check_branch
      %50 = sbr.rel (0) target = $region21
    $region20: #{_forward_impl.1} parent=1 // pred_region
      _
    $region21: #{_forward_impl.1} parent=1 // pred_fallthru
      _
    // Predicated region
    $region22: #{_forward_impl.1} parent=1 // pred_check
      _
    $region23: #{_forward_impl.1} parent=1 // pred_check_branch
      %52 = sbr.rel (0) target = $region25
    $region24: #{_forward_impl.1} parent=1 // pred_region
      %53 = dma.done [#allocation3], 128
    $region25: #{_forward_impl.1} parent=1 // pred_fallthru
      _
    // Predicated region
    $region26: #{_forward_impl.1} parent=1 // pred_check
      _
    $region27: #{_forward_impl.1} parent=1 // pred_check_branch
      %55 = sbr.rel (0) target = $region29
    $region28: #{_forward_impl.1} parent=1 // pred_region
      %56 = dma.done [#allocation6], 512
    $region29: #{_forward_impl.1} parent=1 // pred_fallthru
      _
    // Predicated region
    $region30: #{_forward_impl.1} parent=1 // pred_check
      _
    $region31: #{_forward_impl.1} parent=1 // pred_check_branch
      %58 = sbr.rel (0) target = $region33
    $region32: #{_forward_impl.1} parent=1 // pred_region
      %59 = dma.done [#allocation6], 512
    $region33: #{_forward_impl.1} parent=1 // pred_fallthru
      _
    %v60 = vld [vmem:[#allocation2] sm:$0xff]
    %v61 = vld [vmem:[#allocation5] sm:$0xff]
    %v62 = vld [vmem:[#allocation5 + $0x8] sm:$0xff]
    %v63 = vld [vmem:[#allocation5 + $0x10] sm:$0xff]
    %v64 = vld [vmem:[#allocation5 + $0x18] sm:$0xff]
    %v65 = vld [vmem:[%s2] sm:$0x1]
    %v67 = vlaneseq
    %v68 = vshrl.u32 %v67, 7
    %v69 = vsub.s32 0, %v68
    %v70 = vrot.slane %v65, %v69
    %vm72 = vcmask 261120
    %v74 = vsel %vm72, %v60, 0
    %76 = vmatprep.subr.mxu0 0.0
    %77 = vmatpush1.msra.mxu0 0.0
    %78 = vmatprep.subr.mxu0 0.0
    %79 = vmatpush1.msra.mxu0 0.0
    %80 = vmatprep.subr.mxu0 0.0
    %81 = vmatpush1.msra.mxu0 0.0
    %82 = vmatprep.subr.mxu0 0.0
    %83 = vmatpush1.msra.mxu0 0.0
    %84 = vmatprep.subr.mxu0 0.0
    %85 = vmatpush1.msra.mxu0 0.0
    %86 = vmatprep.subr.mxu0 0.0
    %87 = vmatpush1.msra.mxu0 0.0
    %88 = vmatprep.subr.mxu0 0.0
    %89 = vmatpush1.msra.mxu0 0.0
    %90 = vmatprep.subr.mxu0 0.0
    %91 = vmatpush1.msra.mxu0 0.0
    %92 = vmatprep.subr.mxu0 0.0
    %93 = vmatpush1.msra.mxu0 0.0
    %94 = vmatprep.subr.mxu0 0.0
    %95 = vmatpush1.msra.mxu0 0.0
    %96 = vmatprep.subr.mxu0 0.0
    %97 = vmatpush1.msra.mxu0 0.0
    %98 = vmatprep.subr.mxu0 0.0
    %99 = vmatpush1.msra.mxu0 0.0
    %100 = vmatprep.subr.mxu0 0.0
    %101 = vmatpush1.msra.mxu0 %v64
    %102 = vmatprep.subr.mxu0 0.0
    %103 = vmatpush1.msra.mxu0 %v63
    %104 = vmatprep.subr.mxu0 0.0
    %105 = vmatpush1.msra.mxu0 %v62
    %106 = vmatprep.subr.mxu0 0.0
    %107 = vmatpush1.msra.mxu0 %v61
    %108 = vmatprep.subr.mxu0 0.0
    %109 = vmatpush2.msra.mxu0 0.0
    %110 = vmatprep.subr.mxu0 0.0
    %111 = vmatpush2.msra.mxu0 0.0
    %112 = vmatprep.subr.mxu0 0.0
    %113 = vmatpush2.msra.mxu0 0.0
    %114 = vmatprep.subr.mxu0 0.0
    %115 = vmatpush2.msra.mxu0 0.0
    %116 = vmatprep.subr.mxu0 0.0
    %117 = vmatpush2.msra.mxu0 0.0
    %118 = vmatprep.subr.mxu0 0.0
    %119 = vmatpush2.msra.mxu0 0.0
    %120 = vmatprep.subr.mxu0 0.0
    %121 = vmatpush2.msra.mxu0 0.0
    %122 = vmatprep.subr.mxu0 0.0
    %123 = vmatpush2.msra.mxu0 0.0
    %124 = vmatprep.subr.mxu0 0.0
    %125 = vmatpush2.msra.mxu0 0.0
    %126 = vmatprep.subr.mxu0 0.0
    %127 = vmatpush2.msra.mxu0 0.0
    %128 = vmatprep.subr.mxu0 0.0
    %129 = vmatpush2.msra.mxu0 0.0
    %130 = vmatprep.subr.mxu0 0.0
    %131 = vmatpush2.msra.mxu0 0.0
    %132 = vmatprep.subr.mxu0 0.0
    %133 = vmatpush2.msra.mxu0 0.0
    %134 = vmatprep.subr.mxu0 0.0
    %135 = vmatpush2.msra.mxu0 0.0
    %136 = vmatprep.subr.mxu0 0.0
    %137 = vmatpush2.msra.mxu0 0.0
    %138 = vmatprep.subr.mxu0 0.0
    %139 = vmatpush2.msra.mxu0 0.0
    %140 = vmatprep.mubr.f32.mxu0 0.0
    %141 = vmatmul.mubr.f32.gmra.mxu0 %v74
    %v142 = vpop.f32.mrf.mxu0
    %v143 = vadd.f32 %v70, %v142
    %v144 = vpop.f32.mrf.mxu0
    %145 = vdwg.mxu0
    %v146 = vmax.f32 %v143, 0.0
    %v147 = vld [vmem:[#allocation7] sm:$0xff]
    %v148 = vld [vmem:[#allocation7 + $0x8] sm:$0xff]
    %v149 = vld [vmem:[#allocation7 + $0x10] sm:$0xff]
    %v150 = vld [vmem:[#allocation7 + $0x18] sm:$0xff]
    %v151 = vld [vmem:[%s4] sm:$0x1]
    %v153 = vlaneseq
    %v154 = vshrl.u32 %v153, 7
    %v155 = vsub.s32 0, %v154
    %v156 = vrot.slane %v151, %v155
    %v159 = vsel %vm72, %v146, 0
    %161 = vmatprep.subr.mxu0 0.0
    %162 = vmatpush1.msra.mxu0 0.0
    %163 = vmatprep.subr.mxu0 0.0
    %164 = vmatpush1.msra.mxu0 0.0
    %165 = vmatprep.subr.mxu0 0.0
    %166 = vmatpush1.msra.mxu0 0.0
    %167 = vmatprep.subr.mxu0 0.0
    %168 = vmatpush1.msra.mxu0 0.0
    %169 = vmatprep.subr.mxu0 0.0
    %170 = vmatpush1.msra.mxu0 0.0
    %171 = vmatprep.subr.mxu0 0.0
    %172 = vmatpush1.msra.mxu0 0.0
    %173 = vmatprep.subr.mxu0 0.0
    %174 = vmatpush1.msra.mxu0 0.0
    %175 = vmatprep.subr.mxu0 0.0
    %176 = vmatpush1.msra.mxu0 0.0
    %177 = vmatprep.subr.mxu0 0.0
    %178 = vmatpush1.msra.mxu0 0.0
    %179 = vmatprep.subr.mxu0 0.0
    %180 = vmatpush1.msra.mxu0 0.0
    %181 = vmatprep.subr.mxu0 0.0
    %182 = vmatpush1.msra.mxu0 0.0
    %183 = vmatprep.subr.mxu0 0.0
    %184 = vmatpush1.msra.mxu0 0.0
    %185 = vmatprep.subr.mxu0 0.0
    %186 = vmatpush1.msra.mxu0 %v150
    %187 = vmatprep.subr.mxu0 0.0
    %188 = vmatpush1.msra.mxu0 %v149
    %189 = vmatprep.subr.mxu0 0.0
    %190 = vmatpush1.msra.mxu0 %v148
    %191 = vmatprep.subr.mxu0 0.0
    %192 = vmatpush1.msra.mxu0 %v147
    %193 = vmatprep.subr.mxu0 0.0
    %194 = vmatpush2.msra.mxu0 0.0
    %195 = vmatprep.subr.mxu0 0.0
    %196 = vmatpush2.msra.mxu0 0.0
    %197 = vmatprep.subr.mxu0 0.0
    %198 = vmatpush2.msra.mxu0 0.0
    %199 = vmatprep.subr.mxu0 0.0
    %200 = vmatpush2.msra.mxu0 0.0
    %201 = vmatprep.subr.mxu0 0.0
    %202 = vmatpush2.msra.mxu0 0.0
    %203 = vmatprep.subr.mxu0 0.0
    %204 = vmatpush2.msra.mxu0 0.0
    %205 = vmatprep.subr.mxu0 0.0
    %206 = vmatpush2.msra.mxu0 0.0
    %207 = vmatprep.subr.mxu0 0.0
    %208 = vmatpush2.msra.mxu0 0.0
    %209 = vmatprep.subr.mxu0 0.0
    %210 = vmatpush2.msra.mxu0 0.0
    %211 = vmatprep.subr.mxu0 0.0
    %212 = vmatpush2.msra.mxu0 0.0
    %213 = vmatprep.subr.mxu0 0.0
    %214 = vmatpush2.msra.mxu0 0.0
    %215 = vmatprep.subr.mxu0 0.0
    %216 = vmatpush2.msra.mxu0 0.0
    %217 = vmatprep.subr.mxu0 0.0
    %218 = vmatpush2.msra.mxu0 0.0
    %219 = vmatprep.subr.mxu0 0.0
    %220 = vmatpush2.msra.mxu0 0.0
    %221 = vmatprep.subr.mxu0 0.0
    %222 = vmatpush2.msra.mxu0 0.0
    %223 = vmatprep.subr.mxu0 0.0
    %224 = vmatpush2.msra.mxu0 0.0
    %225 = vmatprep.mubr.f32.mxu0 0.0
    %226 = vmatmul.mubr.f32.gmra.mxu0 %v159
    %v227 = vpop.f32.mrf.mxu0
    %v228 = vadd.f32 %v156, %v227
    %v229 = vpop.f32.mrf.mxu0
    %230 = vdwg.mxu0
    %231 = vst [vmem:[#allocation8] sm:$0xff] %v228
    // Predicated region
    $region34: #{_forward_impl.1} parent=1 // pred_check
      _
    $region35: #{_forward_impl.1} parent=1 // pred_check_branch
      %233 = sbr.rel (0) target = $region37
    $region36: #{_forward_impl.1} parent=1 // pred_region
      %s235 = ssub.s32 128, 128
      %236 = vsyncadd [#allocation4], %s235
      %s238 = sshll.u32 [#allocation8], 4
      %s239 = int_to_ptr.vmem [resolvable:$true] %s238
      %241 = dma.vmem_to_hbm [thread:$0]  %s239, 128, %s5, [#allocation4]
    $region37: #{_forward_impl.1} parent=1 // pred_fallthru
      _
    // Predicated region
    $region38: #{_forward_impl.1} parent=1 // pred_check
      _
    $region39: #{_forward_impl.1} parent=1 // pred_check_branch
      %243 = sbr.rel (0) target = $region41
    $region40: #{_forward_impl.1} parent=1 // pred_region
      %244 = dma.done [#allocation4], 128
    $region41: #{_forward_impl.1} parent=1 // pred_fallthru
      _
    %245 = vsyncpa [#allocation3], 1
    %246 = vsyncpa [#allocation6], 1
    %247 = vsyncpa [#allocation4], 1

</llo_original>
